<compile_context>
chip_gen: v7x
topology: tpu7x:2x2x1
jax: 0.10.0
libtpu: 0.0.40
codegen_flags: <defaults>
</compile_context>

<pallas_src>
import math
from functools import partial

import jax
import jax.numpy as jnp
from jax.experimental import pallas as pl
from jax.experimental.pallas import tpu as pltpu


_LN_EPS = 1e-5
_VMEM_LIMIT = 32 * 1024 * 1024


def _pick_div(dim, cap, align):
    """Largest tile <= cap that divides dim and is a multiple of align (or the full dim)."""
    if dim <= cap:
        return dim
    t = (cap // align) * align
    while t >= align:
        if dim % t == 0:
            return t
        t -= align
    return dim


# ----------------------------- Pallas kernels ------------------------------

def _split_proj_kernel(x_ref, w_ref, b_ref, *rest):
    """Tiled (tm,tk)@(tk,Ntot) matmul with f32 VMEM accumulator; bias add + split into
    n (tm,N) bf16 outputs at the last K step."""
    o_refs, acc_ref = rest[:-1], rest[-1]
    kk = pl.program_id(1)

    @pl.when(kk == 0)
    def _():
        acc_ref[...] = jnp.zeros_like(acc_ref)

    acc_ref[...] += jnp.dot(x_ref[...], w_ref[...], preferred_element_type=jnp.float32)

    @pl.when(kk == pl.num_programs(1) - 1)
    def _():
        y = acc_ref[...] + b_ref[...]
        N = o_refs[0].shape[1]
        for i, o_ref in enumerate(o_refs):
            o_ref[...] = y[:, i * N:(i + 1) * N].astype(o_ref.dtype)


def fused_proj(x2d, w, b, n_split, *, tm_cap=256, tk_cap=512):
    """(M,K)bf16 @ (K, n*N)bf16 + b  ->  tuple of n (M,N) bf16 outputs, one pallas_call."""
    M, K = x2d.shape
    Ntot = w.shape[1]
    assert Ntot % n_split == 0
    N = Ntot // n_split
    tm = _pick_div(M, tm_cap, 8)
    tk = _pick_div(K, tk_cap, 128)
    grid = (M // tm, K // tk)
    out = pl.pallas_call(
        _split_proj_kernel,
        grid=grid,
        out_shape=tuple(jax.ShapeDtypeStruct((M, N), jnp.bfloat16) for _ in range(n_split)),
        in_specs=[pl.BlockSpec((tm, tk), lambda i, k: (i, k)),
                  pl.BlockSpec((tk, Ntot), lambda i, k: (k, 0)),
                  pl.BlockSpec((1, Ntot), lambda i, k: (0, 0))],
        out_specs=tuple(pl.BlockSpec((tm, N), lambda i, k: (i, 0)) for _ in range(n_split)),
        scratch_shapes=[pltpu.VMEM((tm, Ntot), jnp.float32)],
        compiler_params=pltpu.CompilerParams(
            dimension_semantics=("parallel", "arbitrary"),
            vmem_limit_bytes=_VMEM_LIMIT),
        cost_estimate=pl.CostEstimate(
            flops=2 * M * K * Ntot,
            transcendentals=0,
            bytes_accessed=2 * (M * K + K * Ntot + M * Ntot) + 4 * Ntot),
    )(x2d, w, b)
    return out if isinstance(out, tuple) else (out,)


def _ffn_add_ln_kernel(x_ref, w1_ref, b1_ref, w2_ref, b2_ref, g_ref, bt_ref, o_ref, *, eps):
    """Fused FFN: relu(x@W1+b1)@W2+b2 + residual, then LayerNorm. Hidden stays on-chip.
    bf16 MXU operands, f32 accumulation / LN math."""
    x = x_ref[...]                                                   # (tm, D) bf16
    h = jnp.dot(x, w1_ref[...], preferred_element_type=jnp.float32) + b1_ref[...]
    h = jnp.maximum(h, 0.0)
    y = jnp.dot(h.astype(jnp.bfloat16), w2_ref[...],
                preferred_element_type=jnp.float32) + b2_ref[...]
    z = x.astype(jnp.float32) + y
    mean = jnp.mean(z, axis=-1, keepdims=True)
    c = z - mean
    var = jnp.mean(c * c, axis=-1, keepdims=True)
    o_ref[...] = (c * jax.lax.rsqrt(var + eps) * g_ref[...] + bt_ref[...]).astype(o_ref.dtype)


def ffn_add_ln(x2d, w1, b1, w2, b2, gamma, beta, *, eps=_LN_EPS, tm_cap=256):
    M, D = x2d.shape
    F = w1.shape[1]
    tm = _pick_div(M, tm_cap, 8)
    return pl.pallas_call(
        partial(_ffn_add_ln_kernel, eps=eps),
        grid=(M // tm,),
        out_shape=jax.ShapeDtypeStruct((M, D), jnp.bfloat16),
        in_specs=[pl.BlockSpec((tm, D), lambda i: (i, 0)),
                  pl.BlockSpec((D, F), lambda i: (0, 0)),
                  pl.BlockSpec((1, F), lambda i: (0, 0)),
                  pl.BlockSpec((F, D), lambda i: (0, 0)),
                  pl.BlockSpec((1, D), lambda i: (0, 0)),
                  pl.BlockSpec((1, D), lambda i: (0, 0)),
                  pl.BlockSpec((1, D), lambda i: (0, 0))],
        out_specs=pl.BlockSpec((tm, D), lambda i: (i, 0)),
        compiler_params=pltpu.CompilerParams(
            dimension_semantics=("parallel",),
            vmem_limit_bytes=_VMEM_LIMIT),
        cost_estimate=pl.CostEstimate(
            flops=4 * M * D * F + 12 * M * D,
            transcendentals=M,
            bytes_accessed=2 * (2 * M * D + 2 * D * F) + 4 * (F + 3 * D)),
    )(x2d, w1, b1, w2, b2, gamma, beta)


def _mha_proj_ln_kernel(len_ref, q_ref, k_ref, v_ref, wo_ref, bo_ref, res_ref, g_ref, bt_ref,
                        o_ref, acc_ref, *, scale, causal, padded, eps):
    """One (batch, q-block, head) step: softmax(q k^T) v for this head, its contribution to
    the output projection accumulated in f32 VMEM; residual add + LayerNorm in the epilogue
    at the last head.  Masks built in-kernel from the scalar-prefetched key lengths."""
    b = pl.program_id(0)
    qi = pl.program_id(1)
    h = pl.program_id(2)
    nh = pl.num_programs(2)

    @pl.when(h == 0)
    def _():
        acc_ref[...] = jnp.zeros_like(acc_ref)

    q = q_ref[0, 0]                 # (tq, dh) bf16
    k = k_ref[0, 0]                 # (Tk, dh) bf16
    v = v_ref[0, 0]                 # (Tk, dh) bf16
    tq, Tk = q.shape[0], k.shape[0]

    s = jax.lax.dot_general(q, k, (((1,), (1,)), ((), ())),
                            preferred_element_type=jnp.float32) * scale   # (tq, Tk) f32
    if padded:
        klen = len_ref[b]
        col = jax.lax.broadcasted_iota(jnp.int32, (tq, Tk), 1)
        s = jnp.where(col >= klen, jnp.float32(-1e9), s)
    if causal:
        row = jax.lax.broadcasted_iota(jnp.int32, (tq, Tk), 0) + qi * tq
        col = jax.lax.broadcasted_iota(jnp.int32, (tq, Tk), 1)
        s = jnp.where(row >= col, s, jnp.float32(-1e9))

    m = jnp.max(s, axis=-1, keepdims=True)
    p = jnp.exp(s - m)
    denom = jnp.sum(p, axis=-1, keepdims=True)
    oh = jnp.dot(p.astype(jnp.bfloat16), v, preferred_element_type=jnp.float32)
    oh = oh * pl.reciprocal(denom, approx=True)                            # (tq, dh) f32

    # per-head out-projection contribution:  attn @ Wo == sum_h oh @ Wo[h*dh:(h+1)*dh, :]
    acc_ref[...] += jnp.dot(oh.astype(jnp.bfloat16), wo_ref[0],
                            preferred_element_type=jnp.float32)            # (tq, D)

    @pl.when(h == nh - 1)
    def _():
        z = acc_ref[...] + bo_ref[...] + res_ref[0].astype(jnp.float32)
        mean = jnp.mean(z, axis=-1, keepdims=True)
        c = z - mean
        var = jnp.mean(c * c, axis=-1, keepdims=True)
        o_ref[0] = (c * jax.lax.rsqrt(var + eps) * g_ref[...] + bt_ref[...]).astype(o_ref.dtype)


def mha_proj_ln(q, k, v, wo_h, bo, res, gamma, beta, key_len, *, causal, padded,
                eps=_LN_EPS, tq_cap=256):
    """q/k/v: head-major (B,H,T,dh) bf16. Fuses attention + out-proj + residual + LN.
    Output: (B, Tq, D) bf16."""
    B, H, Tq, dh = q.shape
    Tk = k.shape[2]
    D = H * dh
    tq = _pick_div(Tq, tq_cap, 8)
    nq = Tq // tq
    return pl.pallas_call(
        partial(_mha_proj_ln_kernel, scale=1.0 / math.sqrt(dh),
                causal=causal, padded=padded, eps=eps),
        out_shape=jax.ShapeDtypeStruct((B, Tq, D), jnp.bfloat16),
        grid_spec=pltpu.PrefetchScalarGridSpec(
            num_scalar_prefetch=1,
            grid=(B, nq, H),
            in_specs=[pl.BlockSpec((1, 1, tq, dh), lambda b, qi, h, lens: (b, h, qi, 0)),
                      pl.BlockSpec((1, 1, Tk, dh), lambda b, qi, h, lens: (b, h, 0, 0)),
                      pl.BlockSpec((1, 1, Tk, dh), lambda b, qi, h, lens: (b, h, 0, 0)),
                      pl.BlockSpec((1, dh, D), lambda b, qi, h, lens: (h, 0, 0)),
                      pl.BlockSpec((1, D), lambda b, qi, h, lens: (0, 0)),
                      pl.BlockSpec((1, tq, D), lambda b, qi, h, lens: (b, qi, 0)),
                      pl.BlockSpec((1, D), lambda b, qi, h, lens: (0, 0)),
                      pl.BlockSpec((1, D), lambda b, qi, h, lens: (0, 0))],
            out_specs=pl.BlockSpec((1, tq, D), lambda b, qi, h, lens: (b, qi, 0)),
            scratch_shapes=[pltpu.VMEM((tq, D), jnp.float32)]),
        compiler_params=pltpu.CompilerParams(
            dimension_semantics=("parallel", "parallel", "arbitrary"),
            vmem_limit_bytes=_VMEM_LIMIT),
        cost_estimate=pl.CostEstimate(
            flops=B * H * (4 * Tq * Tk * dh + 2 * Tq * dh * D) + 8 * B * Tq * D,
            transcendentals=B * H * Tq * Tk,
            bytes_accessed=2 * (B * H * (Tq + 2 * Tk) * dh + 2 * B * Tq * D + D * D)
                           + 4 * 3 * D),
    )(key_len.astype(jnp.int32), q, k, v, wo_h, bo, res, gamma, beta)


# ----------------------------- model pieces (glue + kernel calls) ----------

def _to_heads(x2d, B, T, H):
    """(B*T, D) -> head-major (B, H, T, dh)."""
    D = x2d.shape[-1]
    return x2d.reshape(B, T, H, D // H).transpose(0, 2, 1, 3)


def encoder_layer(p, x, src_len, nhead):
    B, T, D = x.shape
    x2d = x.reshape(-1, D)
    sa = p["self_attn"]
    q, k, v = fused_proj(x2d, sa["wqkv"], sa["bqkv"], 3)
    x = mha_proj_ln(_to_heads(q, B, T, nhead), _to_heads(k, B, T, nhead),
                    _to_heads(v, B, T, nhead), sa["wo_h"], sa["bo"], x,
                    p["ln1_g"], p["ln1_b"], src_len, causal=False, padded=True)
    x2d = ffn_add_ln(x.reshape(-1, D), p["ff_w1"], p["ff_b1"], p["ff_w2"], p["ff_b2"],
                     p["ln2_g"], p["ln2_b"])
    return x2d.reshape(B, T, D)


def decoder_layer(p, x, memory, src_len, tgt_full_len, nhead):
    B, T, D = x.shape
    S = memory.shape[1]
    x2d = x.reshape(-1, D)

    # self-attention: causal mask only (matches nn.TransformerDecoder w/o tgt_key_padding_mask)
    sa = p["self_attn"]
    q, k, v = fused_proj(x2d, sa["wqkv"], sa["bqkv"], 3)
    x = mha_proj_ln(_to_heads(q, B, T, nhead), _to_heads(k, B, T, nhead),
                    _to_heads(v, B, T, nhead), sa["wo_h"], sa["bo"], x,
                    p["ln1_g"], p["ln1_b"], tgt_full_len, causal=True, padded=False)

    # cross-attention: memory key-padding mask from src_len
    ca = p["cross_attn"]
    (q,) = fused_proj(x.reshape(-1, D), ca["wq"], ca["bq"], 1)
    k, v = fused_proj(memory.reshape(-1, D), ca["wkv"], ca["bkv"], 2)
    x = mha_proj_ln(_to_heads(q, B, T, nhead), _to_heads(k, B, S, nhead),
                    _to_heads(v, B, S, nhead), ca["wo_h"], ca["bo"], x,
                    p["ln2_g"], p["ln2_b"], src_len, causal=False, padded=True)

    x2d = ffn_add_ln(x.reshape(-1, D), p["ff_w1"], p["ff_b1"], p["ff_w2"], p["ff_b2"],
                     p["ln3_g"], p["ln3_b"])
    return x2d.reshape(B, T, D)


def sinusoidal_pe(max_len, d_model):
    # matches layers.PositionalEncoding (batch_first=True, scale=1.0, scale_mode='none')
    position = jnp.arange(max_len, dtype=jnp.float32)[:, None]
    div_term = jnp.exp(jnp.arange(0, d_model, 2, dtype=jnp.float32)
                       * (-math.log(10000.0) / d_model))
    pe = jnp.zeros((max_len, d_model), dtype=jnp.float32)
    pe = pe.at[:, 0::2].set(jnp.sin(position * div_term))
    pe = pe.at[:, 1::2].set(jnp.cos(position * div_term))
    return pe


def forward(params, src, src_len, target, target_len, teacher_forcing, cfg):
    """Equivalent of TransformerEncDecModel.forward (mode='enc_dec', scale_mode='none')."""
    if not teacher_forcing:
        # TODO(synk): greedy decoding (run_greedy) has a data-dependent Python loop with early
        # stopping; only the teacher-forcing path is implemented here.
        raise NotImplementedError("only teacher_forcing=True is implemented")

    B = src.shape[0]
    D = cfg["state_size"]
    nhead = cfg["nhead"]
    encoder_sos = cfg["n_input_tokens"] + 1
    decoder_sos_eos = cfg["n_out_tokens"]

    # F.pad(src, (1, 0), value=encoder_sos); src_len += 1
    src = jnp.concatenate([jnp.full((B, 1), encoder_sos, dtype=src.dtype), src], axis=1)
    src_len = src_len + 1
    S = src.shape[1]

    # embeddings + positional encoding (f32 math), then bf16 for the kernel data path
    src_e = (jnp.take(params["input_embedding"], src, axis=0)
             + params["pe"][None, :S, :]).astype(jnp.bfloat16)

    tgt_in = jnp.concatenate(
        [jnp.full((B, 1), decoder_sos_eos, dtype=target.dtype), target[:, :-1]], axis=1)
    T = tgt_in.shape[1]
    tgt_e = (jnp.take(params["output_embedding"], tgt_in, axis=0)
             + params["pe"][None, :T, :]).astype(jnp.bfloat16)

    src_len_i32 = src_len.astype(jnp.int32)
    tgt_full_len = jnp.full((B,), T, dtype=jnp.int32)   # decoder self-attn: no key padding

    # encoder
    mem = src_e
    for lp in params["encoder_layers"]:
        mem = encoder_layer(lp, mem, src_len_i32, nhead)

    # decoder
    x = tgt_e
    for lp in params["decoder_layers"]:
        x = decoder_layer(lp, x, mem, src_len_i32, tgt_full_len, nhead)

    # output map: pre-padded 128-lane weight (prep_params); real logits sliced back in JAX
    n_out = cfg["n_out_tokens"] + 1
    (logits_pad,) = fused_proj(x.reshape(-1, D), params["out_map_w"], params["out_map_b"], 1)
    out = logits_pad[:, :n_out].reshape(B, T, n_out).astype(jnp.float32)
    return {"data": out, "length": target_len}


# ----------------------------- parameter init & prep -----------------------

def init_params(key, cfg):
    """Float32 parameters, torch-like init."""
    D = cfg["state_size"]
    F = cfg["dim_feedforward"]
    keys = iter(jax.random.split(key, 512))

    def xavier(shape):
        fan_in, fan_out = shape[0], shape[1]
        lim = math.sqrt(6.0 / (fan_in + fan_out))
        return jax.random.uniform(next(keys), shape, jnp.float32, -lim, lim)

    def attn_self():
        wqkv = jnp.concatenate([xavier((D, D)) for _ in range(3)], axis=1)   # fused q|k|v
        return {"wqkv": wqkv, "bqkv": jnp.zeros((3 * D,), jnp.float32),
                "wo": xavier((D, D)), "bo": jnp.zeros((D,), jnp.float32)}

    def attn_cross():
        wkv = jnp.concatenate([xavier((D, D)) for _ in range(2)], axis=1)    # fused k|v
        return {"wq": xavier((D, D)), "bq": jnp.zeros((D,), jnp.float32),
                "wkv": wkv, "bkv": jnp.zeros((2 * D,), jnp.float32),
                "wo": xavier((D, D)), "bo": jnp.zeros((D,), jnp.float32)}

    def enc_layer():
        return {"self_attn": attn_self(),
                "ln1_g": jnp.ones((D,), jnp.float32), "ln1_b": jnp.zeros((D,), jnp.float32),
                "ff_w1": xavier((D, F)), "ff_b1": jnp.zeros((F,), jnp.float32),
                "ff_w2": xavier((F, D)), "ff_b2": jnp.zeros((D,), jnp.float32),
                "ln2_g": jnp.ones((D,), jnp.float32), "ln2_b": jnp.zeros((D,), jnp.float32)}

    def dec_layer():
        return {"self_attn": attn_self(), "cross_attn": attn_cross(),
                "ln1_g": jnp.ones((D,), jnp.float32), "ln1_b": jnp.zeros((D,), jnp.float32),
                "ln2_g": jnp.ones((D,), jnp.float32), "ln2_b": jnp.zeros((D,), jnp.float32),
                "ff_w1": xavier((D, F)), "ff_b1": jnp.zeros((F,), jnp.float32),
                "ff_w2": xavier((F, D)), "ff_b2": jnp.zeros((D,), jnp.float32),
                "ln3_g": jnp.ones((D,), jnp.float32), "ln3_b": jnp.zeros((D,), jnp.float32)}

    n_in_emb_rows = cfg["n_input_tokens"] + 2   # + eos + sos
    n_out_emb_rows = cfg["n_out_tokens"] + 1    # + sos/eos
    return {
        # 'pytorch' embedding init is N(0, 1)
        "input_embedding": jax.random.normal(next(keys), (n_in_emb_rows, D), jnp.float32),
        "output_embedding": jax.random.normal(next(keys), (n_out_emb_rows, D), jnp.float32),
        "out_map_w": xavier((D, cfg["n_out_tokens"] + 1)),
        "out_map_b": jnp.zeros((cfg["n_out_tokens"] + 1,), jnp.float32),
        "encoder_layers": [enc_layer() for _ in range(cfg["num_encoder_layers"])],
        "decoder_layers": [dec_layer() for _ in range(cfg["num_decoder_layers"])],
        "pe": sinusoidal_pe(cfg["max_len"], D),
    }


def prep_params(params, cfg):
    """One-time inference prep: bf16 matmul weights, head-major Wo, (1,N) f32 biases/LN
    params, out_map padded to a lane-dense 128 multiple."""
    D = cfg["state_size"]
    H = cfg["nhead"]
    dh = D // H
    bf = lambda a: a.astype(jnp.bfloat16)
    row = lambda a: a.reshape(1, -1).astype(jnp.float32)

    def attn_self(a):
        return {"wqkv": bf(a["wqkv"]), "bqkv": row(a["bqkv"]),
                "wo_h": bf(a["wo"]).reshape(H, dh, D), "bo": row(a["bo"])}

    def attn_cross(a):
        return {"wq": bf(a["wq"]), "bq": row(a["bq"]),
                "wkv": bf(a["wkv"]), "bkv": row(a["bkv"]),
                "wo_h": bf(a["wo"]).reshape(H, dh, D), "bo": row(a["bo"])}

    def layer(p, names):
        out = {}
        if "self_attn" in p:
            out["self_attn"] = attn_self(p["self_attn"])
        if "cross_attn" in p:
            out["cross_attn"] = attn_cross(p["cross_attn"])
        out["ff_w1"] = bf(p["ff_w1"]); out["ff_b1"] = row(p["ff_b1"])
        out["ff_w2"] = bf(p["ff_w2"]); out["ff_b2"] = row(p["ff_b2"])
        for n in names:
            out[n + "_g"] = row(p[n + "_g"]); out[n + "_b"] = row(p[n + "_b"])
        return out

    n_out = cfg["n_out_tokens"] + 1
    n_pad = ((n_out + 127) // 128) * 128
    return {
        "input_embedding": params["input_embedding"],
        "output_embedding": params["output_embedding"],
        "pe": params["pe"],
        "out_map_w": bf(jnp.pad(params["out_map_w"], ((0, 0), (0, n_pad - n_out)))),
        "out_map_b": jnp.pad(params["out_map_b"], (0, n_pad - n_out)).reshape(1, -1),
        "encoder_layers": [layer(p, ["ln1", "ln2"]) for p in params["encoder_layers"]],
        "decoder_layers": [layer(p, ["ln1", "ln2", "ln3"]) for p in params["decoder_layers"]],
    }


# ----------------------------- main -----------------------------------------

if __name__ == "__main__":
    cfg = dict(
        n_input_tokens=10,
        n_out_tokens=10,
        state_size=32,
        nhead=4,
        dim_feedforward=32,     # ff_multiplier = 1
        num_encoder_layers=2,
        num_decoder_layers=2,
        max_len=64,
    )

    root = jax.random.PRNGKey(0)
    pkey, k_src, k_tgt = jax.random.split(root, 3)
    params = prep_params(init_params(pkey, cfg), cfg)

    B, S, T = 2, 8, 8
    src = jax.random.randint(k_src, (B, S), 0, cfg["n_input_tokens"], dtype=jnp.int32)
    target = jax.random.randint(k_tgt, (B, T), 0, cfg["n_out_tokens"], dtype=jnp.int32)
    src_len = jnp.array([8, 6], dtype=jnp.int32)
    target_len = jnp.array([8, 5], dtype=jnp.int32)

    res = forward(params, src, src_len, target, target_len,
                  teacher_forcing=True, cfg=cfg)
    jax.block_until_ready(res["data"])

    assert res["data"].shape == (B, T, cfg["n_out_tokens"] + 1)
    assert res["length"].shape == (B,)
    assert bool(jnp.all(jnp.isfinite(res["data"])))
    print("KERNEL_OK")
</pallas_src>

<mosaic_0001>
module attributes {stable_mosaic.version = 11 : i64} {
  func.func @_split_proj_kernel(%arg0: i32, %arg1: i32, %arg2: memref<18x32xbf16, #tpu.memory_space<vmem>>, %arg3: memref<32x96xbf16, #tpu.memory_space<vmem>>, %arg4: memref<1x96xf32, #tpu.memory_space<vmem>>, %arg5: memref<18x32xbf16, #tpu.memory_space<vmem>>, %arg6: memref<18x32xbf16, #tpu.memory_space<vmem>>, %arg7: memref<18x32xbf16, #tpu.memory_space<vmem>>, %arg8: memref<18x96xf32, #tpu.memory_space<vmem>>) attributes {dimension_semantics = [#tpu.dimension_semantics<parallel>, #tpu.dimension_semantics<arbitrary>], iteration_bounds = array<i64: 1, 1>, scalar_prefetch = 0 : i64, scratch_operands = 1 : i64, tpu.core_type = #tpu.core_type<tc>, window_params = [{transform_indices = @transform_0, window_bounds = array<i64: 18, 32>}, {transform_indices = @transform_1, window_bounds = array<i64: 32, 96>}, {pipeline_mode = #tpu.pipeline_mode<synchronous>, transform_indices = @transform_2, window_bounds = array<i64: 1, 96>}, {transform_indices = @transform_3, window_bounds = array<i64: 18, 32>}, {transform_indices = @transform_4, window_bounds = array<i64: 18, 32>}, {transform_indices = @transform_5, window_bounds = array<i64: 18, 32>}]} {
    %c0_i32 = arith.constant 0 : i32
    %0 = arith.cmpi eq, %arg1, %c0_i32 : i32
    %1 = arith.extui %0 : i1 to i32
    %c0_i32_0 = arith.constant 0 : i32
    %2 = arith.cmpi ne, %1, %c0_i32_0 : i32
    scf.if %2 {
      %cst_10 = arith.constant 0.000000e+00 : f32
      %12 = vector.broadcast %cst_10 : f32 to vector<18x96xf32>
      %c0_11 = arith.constant 0 : index
      %c0_12 = arith.constant 0 : index
      %13 = vector.load %arg8[%c0_11, %c0_12] : memref<18x96xf32, #tpu.memory_space<vmem>>, vector<18x96xf32>
      tpu.vector_store %arg8[%c0_11, %c0_12], %12 {strides = array<i32>} : memref<18x96xf32, #tpu.memory_space<vmem>>, vector<18x96xf32>,
    } else {
    }
    %c0 = arith.constant 0 : index
    %c0_1 = arith.constant 0 : index
    %3 = vector.load %arg8[%c0, %c0_1] : memref<18x96xf32, #tpu.memory_space<vmem>>, vector<18x96xf32>
    %c0_2 = arith.constant 0 : index
    %c0_3 = arith.constant 0 : index
    %4 = vector.load %arg2[%c0_2, %c0_3] : memref<18x32xbf16, #tpu.memory_space<vmem>>, vector<18x32xbf16>
    %c0_4 = arith.constant 0 : index
    %c0_5 = arith.constant 0 : index
    %5 = vector.load %arg3[%c0_4, %c0_5] : memref<32x96xbf16, #tpu.memory_space<vmem>>, vector<32x96xbf16>
    %cst = arith.constant dense<0.000000e+00> : vector<18x96xf32>
    %6 = tpu.matmul %4, %5, %cst {dimension_numbers = #tpu.dot_dimension_numbers<[1], [0], [0], [1], [0, 0, 1, 1], [], []>} : vector<18x32xbf16>, vector<32x96xbf16>, vector<18x96xf32> -> vector<18x96xf32>
    %7 = arith.addf %3, %6 : vector<18x96xf32>
    %c0_6 = arith.constant 0 : index
    %c0_7 = arith.constant 0 : index
    %8 = vector.load %arg8[%c0_6, %c0_7] : memref<18x96xf32, #tpu.memory_space<vmem>>, vector<18x96xf32>
    tpu.vector_store %arg8[%c0_6, %c0_7], %7 {strides = array<i32>} : memref<18x96xf32, #tpu.memory_space<vmem>>, vector<18x96xf32>,
    %c0_i32_8 = arith.constant 0 : i32
    %9 = arith.cmpi eq, %arg1, %c0_i32_8 : i32
    %10 = arith.extui %9 : i1 to i32
    %c0_i32_9 = arith.constant 0 : i32
    %11 = arith.cmpi ne, %10, %c0_i32_9 : i32
    scf.if %11 {
      %c0_10 = arith.constant 0 : index
      %c0_11 = arith.constant 0 : index
      %12 = vector.load %arg8[%c0_10, %c0_11] : memref<18x96xf32, #tpu.memory_space<vmem>>, vector<18x96xf32>
      %c0_12 = arith.constant 0 : index
      %c0_13 = arith.constant 0 : index
      %13 = vector.load %arg4[%c0_12, %c0_13] : memref<1x96xf32, #tpu.memory_space<vmem>>, vector<1x96xf32>
      %14 = vector.broadcast %13 : vector<1x96xf32> to vector<18x96xf32>
      %15 = arith.addf %12, %14 : vector<18x96xf32>
      %16 = vector.extract_strided_slice %15 {offsets = [0, 0], sizes = [18, 32], strides = [1, 1]} : vector<18x96xf32> to vector<18x32xf32>
      %17 = arith.truncf %16 : vector<18x32xf32> to vector<18x32xbf16>
      %c0_14 = arith.constant 0 : index
      %c0_15 = arith.constant 0 : index
      %18 = vector.load %arg5[%c0_14, %c0_15] : memref<18x32xbf16, #tpu.memory_space<vmem>>, vector<18x32xbf16>
      tpu.vector_store %arg5[%c0_14, %c0_15], %17 {strides = array<i32>} : memref<18x32xbf16, #tpu.memory_space<vmem>>, vector<18x32xbf16>,
      %19 = vector.extract_strided_slice %15 {offsets = [0, 32], sizes = [18, 32], strides = [1, 1]} : vector<18x96xf32> to vector<18x32xf32>
      %20 = arith.truncf %19 : vector<18x32xf32> to vector<18x32xbf16>
      %c0_16 = arith.constant 0 : index
      %c0_17 = arith.constant 0 : index
      %21 = vector.load %arg6[%c0_16, %c0_17] : memref<18x32xbf16, #tpu.memory_space<vmem>>, vector<18x32xbf16>
      tpu.vector_store %arg6[%c0_16, %c0_17], %20 {strides = array<i32>} : memref<18x32xbf16, #tpu.memory_space<vmem>>, vector<18x32xbf16>,
      %22 = vector.extract_strided_slice %15 {offsets = [0, 64], sizes = [18, 32], strides = [1, 1]} : vector<18x96xf32> to vector<18x32xf32>
      %23 = arith.truncf %22 : vector<18x32xf32> to vector<18x32xbf16>
      %c0_18 = arith.constant 0 : index
      %c0_19 = arith.constant 0 : index
      %24 = vector.load %arg7[%c0_18, %c0_19] : memref<18x32xbf16, #tpu.memory_space<vmem>>, vector<18x32xbf16>
      tpu.vector_store %arg7[%c0_18, %c0_19], %23 {strides = array<i32>} : memref<18x32xbf16, #tpu.memory_space<vmem>>, vector<18x32xbf16>,
    } else {
    }
    return
  }
  func.func @transform_0(%arg0: i32, %arg1: i32) -> (i32, i32) {
    %c0_i32 = arith.constant 0 : i32
    return %arg0, %arg1 : i32, i32
  }
  func.func @transform_1(%arg0: i32, %arg1: i32) -> (i32, i32) {
    %c0_i32 = arith.constant 0 : i32
    %c0_i32_0 = arith.constant 0 : i32
    return %arg1, %c0_i32 : i32, i32
  }
  func.func @transform_2(%arg0: i32, %arg1: i32) -> (i32, i32) {
    %c0_i32 = arith.constant 0 : i32
    %c0_i32_0 = arith.constant 0 : i32
    %c0_i32_1 = arith.constant 0 : i32
    return %c0_i32, %c0_i32_0 : i32, i32
  }
  func.func @transform_3(%arg0: i32, %arg1: i32) -> (i32, i32) {
    %c0_i32 = arith.constant 0 : i32
    %c0_i32_0 = arith.constant 0 : i32
    return %arg0, %c0_i32 : i32, i32
  }
  func.func @transform_4(%arg0: i32, %arg1: i32) -> (i32, i32) {
    %c0_i32 = arith.constant 0 : i32
    %c0_i32_0 = arith.constant 0 : i32
    return %arg0, %c0_i32 : i32, i32
  }
  func.func @transform_5(%arg0: i32, %arg1: i32) -> (i32, i32) {
    %c0_i32 = arith.constant 0 : i32
    %c0_i32_0 = arith.constant 0 : i32
    return %arg0, %c0_i32 : i32, i32
  }
}

</mosaic_0001>

<llo_original>
// kernel: tpu_custom_call.1
$region0: #{tpu_custom_call.1}
  #allocation0 [shape = 'u32[]', space=smem, size = 0x4, offset = 0x4, fixed_abs, tag = 'smem constant byte address 0x4 - core index']
  #allocation1 [shape = 'u32[144,128]{1,0:T(1,128)}', space=vmem, size = 0x12000, scoped, tag = 'internal scratch']
  #allocation2 [shape = 'f32[18,96]{1,0:T(8,128)}', space=vmem, size = 0x3000, scoped, tag = 'scratch operand']
  %s0 = inlined_call_operand.hbm [shape: bf16[18,32], index: 0, kind: input, shape index: {}]
  %s1 = inlined_call_operand.hbm [shape: bf16[32,96], index: 1, kind: input, shape index: {}]
  %s2 = inlined_call_operand.vmem [shape: f32[1,96], index: 2, kind: input, shape index: {}]
  %s3 = inlined_call_operand.hbm [shape: bf16[18,32], index: 3, kind: output, shape index: {0}]
  %s4 = inlined_call_operand.hbm [shape: bf16[18,32], index: 4, kind: output, shape index: {1}]
  %s5 = inlined_call_operand.hbm [shape: bf16[18,32], index: 5, kind: output, shape index: {2}]
  %6 = xla_tuple %s3, %s4, %s5
  %s7 = sld [smem:[#allocation0]]
  $region54: #{tpu_custom_call.1} parent=0
    _
  %s9 = ssub.s32 1, %s7
  %s10 = scalar_select 0, %s9, %s7
  $region1: #{tpu_custom_call.1} parent=0
    #allocation3 [shape = 'u8[6144]{0}', space=vmem, size = 0x1800, scoped, tag = 'input window, operand 0, single buffered']
    #allocation4 [shape = 's32[1]{0}', space=sflag, size = 0x4, scoped, tag = 'scoped memory for tpu_custom_call.1']
    #allocation5 [shape = 's32[1]{0}', space=sflag, size = 0x4, scoped, tag = 'scoped memory for tpu_custom_call.1']
    #allocation6 [shape = 'u8[8192]{0}', space=vmem, size = 0x2000, scoped, tag = 'input window, operand 1, single buffered']
    #allocation7 [shape = 's32[1]{0}', space=sflag, size = 0x4, scoped, tag = 'scoped memory for tpu_custom_call.1']
    #allocation8 [shape = 'u8[6144]{0}', space=vmem, size = 0x1800, scoped, tag = 'output window, operand 0, single buffered']
    #allocation9 [shape = 'u8[6144]{0}', space=vmem, size = 0x1800, scoped, tag = 'output window, operand 1, single buffered']
    #allocation10 [shape = 's32[1]{0}', space=sflag, size = 0x4, scoped, tag = 'scoped memory for tpu_custom_call.1']
    #allocation11 [shape = 'u8[6144]{0}', space=vmem, size = 0x1800, scoped, tag = 'output window, operand 2, single buffered']
    %11 = vsyncpa [#allocation4], 0
    %12 = vsyncpa [#allocation7], 0
    %13 = vsyncpa [#allocation5], 0
    %14 = vsyncpa [#allocation10], 0
    // Predicated region
    $region2: #{tpu_custom_call.1} parent=1 // pred_check
      _
    $region3: #{tpu_custom_call.1} parent=1 // pred_check_branch
      %16 = sbr.rel (0) target = $region5
    $region4: #{tpu_custom_call.1} parent=1 // pred_region
      %s18 = ssub.s32 192, 192
      %19 = vsyncadd [#allocation4], %s18
      %s20 = sshll.u32 [#allocation3], 4
      %s21 = int_to_ptr.vmem [resolvable:$true] %s20
      %26 = dma.hbm_to_vmem [thread:$0]  %s0, 192, %s21, [#allocation4], 64, 64, 4
    $region5: #{tpu_custom_call.1} parent=1 // pred_fallthru
      _
    // Predicated region
    $region6: #{tpu_custom_call.1} parent=1 // pred_check
      _
    $region7: #{tpu_custom_call.1} parent=1 // pred_check_branch
      %28 = sbr.rel (0) target = $region9
    $region8: #{tpu_custom_call.1} parent=1 // pred_region
      %s30 = ssub.s32 256, 256
      %31 = vsyncadd [#allocation7], %s30
      %s32 = sshll.u32 [#allocation6], 4
      %s33 = int_to_ptr.vmem [resolvable:$true] %s32
      %38 = dma.hbm_to_vmem [thread:$0]  %s1, 256, %s33, [#allocation7], 64, 64, 4
    $region9: #{tpu_custom_call.1} parent=1 // pred_fallthru
      _
    // Predicated region
    $region10: #{tpu_custom_call.1} parent=1 // pred_check
      _
    $region11: #{tpu_custom_call.1} parent=1 // pred_check_branch
      %40 = sbr.rel (0) target = $region13
    $region12: #{tpu_custom_call.1} parent=1 // pred_region
      _
    $region13: #{tpu_custom_call.1} parent=1 // pred_fallthru
      _
    // Predicated region
    $region14: #{tpu_custom_call.1} parent=1 // pred_check
      _
    $region15: #{tpu_custom_call.1} parent=1 // pred_check_branch
      %42 = sbr.rel (0) target = $region17
    $region16: #{tpu_custom_call.1} parent=1 // pred_region
      %43 = dma.done [#allocation4], 192
    $region17: #{tpu_custom_call.1} parent=1 // pred_fallthru
      _
    // Predicated region
    $region18: #{tpu_custom_call.1} parent=1 // pred_check
      _
    $region19: #{tpu_custom_call.1} parent=1 // pred_check_branch
      %45 = sbr.rel (0) target = $region21
    $region20: #{tpu_custom_call.1} parent=1 // pred_region
      %46 = dma.done [#allocation7], 256
    $region21: #{tpu_custom_call.1} parent=1 // pred_fallthru
      _
    %p48 = scmp.eq.s32.totalorder 0, 0
    // Predicated region
    $region22: #{tpu_custom_call.1} parent=1 // pred_check
      %p49 = pneg %p48
    $region23: #{tpu_custom_call.1} parent=1 // pred_check_branch
      %51 = sbr.rel (%p49) target = $region25
    $region24: #{tpu_custom_call.1} parent=1 // pred_region
      %vm52 = vcmask 785408
      %53 = vst.msk [vmem:[#allocation2] sm:$0xff] %vm52, 0.0
      %54 = vst.msk [vmem:[#allocation2 + $0x8] sm:$0xff] %vm52, 0.0
      %vm55 = vcmask 779264
      %56 = vst.msk [vmem:[#allocation2 + $0x10] sm:$0x3] %vm55, 0.0
    $region25: #{tpu_custom_call.1} parent=1 // pred_fallthru
      _
    %v57 = vld [vmem:[#allocation2] sm:$0xff]
    %v58 = vld [vmem:[#allocation2 + $0x8] sm:$0xff]
    %v59 = vld [vmem:[#allocation2 + $0x10] sm:$0x3]
    %v60 = vld [vmem:[#allocation3] sm:$0xf]
    %v61 = vld [vmem:[#allocation3 + $0x4] sm:$0xf]
    %v62 = vld [vmem:[#allocation3 + $0x8] sm:$0x1]
    %v63 = vld [vmem:[#allocation6] sm:$0xf]
    %v64 = vld [vmem:[#allocation6 + $0x4] sm:$0xf]
    %v65 = vld [vmem:[#allocation6 + $0x8] sm:$0xf]
    %v66 = vld [vmem:[#allocation6 + $0xc] sm:$0xf]
    %v70 = vunpack.c.l.b16 %v60
    %v71 = vunpack.c.l.b16 %v61
    %v72 = vunpack.c.l.b16 %v62
    %v73 = vpack.c.b16 %v71, %v70
    %v74 = vpack.c.b16 %v72, %v72
    %v79 = vunpack.c.l.b16 %v63
    %v80 = vunpack.c.l.b16 %v64
    %v81 = vunpack.c.l.b16 %v65
    %v82 = vunpack.c.l.b16 %v66
    %v83 = vpack.c.b16 %v80, %v79
    %v84 = vpack.c.b16 %v82, %v81
    %vm87 = vcmask 261120
    %v89 = vsel %vm87, %v73, 0
    %v92 = vsel %vm87, %v74, 0
    %94 = vmatprep.subr.bf16.mxu0 0
    %95 = vmatpush1.bf16.msra.mxu0 %v83
    %96 = vmatprep.subr.bf16.mxu0 0
    %97 = vmatpush1.bf16.msra.mxu0 %v84
    %98 = vmatprep.subr.bf16.mxu0 0
    %99 = vmatpush1.bf16.msra.mxu0 0
    %100 = vmatprep.subr.bf16.mxu0 0
    %101 = vmatpush1.bf16.msra.mxu0 0
    %102 = vmatprep.subr.bf16.mxu0 0
    %103 = vmatpush1.bf16.msra.mxu0 0
    %104 = vmatprep.subr.bf16.mxu0 0
    %105 = vmatpush1.bf16.msra.mxu0 0
    %106 = vmatprep.subr.bf16.mxu0 0
    %107 = vmatpush1.bf16.msra.mxu0 0
    %108 = vmatprep.subr.bf16.mxu0 0
    %109 = vmatpush1.bf16.msra.mxu0 0
    %110 = vmatprep.subr.bf16.mxu0 0
    %111 = vmatpush1.bf16.msra.mxu0 0
    %112 = vmatprep.subr.bf16.mxu0 0
    %113 = vmatpush1.bf16.msra.mxu0 0
    %114 = vmatprep.subr.bf16.mxu0 0
    %115 = vmatpush1.bf16.msra.mxu0 0
    %116 = vmatprep.subr.bf16.mxu0 0
    %117 = vmatpush1.bf16.msra.mxu0 0
    %118 = vmatprep.subr.bf16.mxu0 0
    %119 = vmatpush1.bf16.msra.mxu0 0
    %120 = vmatprep.subr.bf16.mxu0 0
    %121 = vmatpush1.bf16.msra.mxu0 0
    %122 = vmatprep.subr.bf16.mxu0 0
    %123 = vmatpush1.bf16.msra.mxu0 0
    %124 = vmatprep.subr.bf16.mxu0 0
    %125 = vmatpush1.bf16.msra.mxu0 0
    %126 = vmatprep.mubr.bf16.mxu0 0
    %127 = vmatmul.mubr.bf16.gmra.mrb[0].mxu0 %v89
    %v128 = vpop.f32.mrb[0].mxu0
    %v129 = vadd.f32 0.0, %v128
    %v130 = vpop.f32.mrb[0].mxu0
    %v131 = vpop.f32.mrb[0].mxu0
    %v132 = vadd.f32 0.0, %v131
    %v133 = vpop.f32.mrb[0].mxu0
    %134 = vmatprep.mubr.bf16.mxu0 0
    %135 = vmatmul.mubr.bf16.gmra.mrb[0].mxu0 %v92
    %v136 = vpop.f32.mrb[0].mxu0
    %v137 = vadd.f32 0.0, %v136
    %v138 = vpop.f32.mrb[0].mxu0
    %v139 = vpop.f32.mrb[0].mxu0
    %v140 = vpop.f32.mrb[0].mxu0
    %141 = vdwg.mxu0
    %v142 = vadd.f32 %v57, %v129
    %v143 = vadd.f32 %v58, %v132
    %v144 = vadd.f32 %v59, %v137
    %vm145 = vcmask 785408
    %146 = vst.msk [vmem:[#allocation2] sm:$0xff] %vm145, %v142
    %147 = vst.msk [vmem:[#allocation2 + $0x8] sm:$0xff] %vm145, %v143
    %vm148 = vcmask 779264
    %149 = vst.msk [vmem:[#allocation2 + $0x10] sm:$0x3] %vm148, %v144
    // Predicated region
    $region26: #{tpu_custom_call.1} parent=1 // pred_check
      %p150 = pneg %p48
    $region27: #{tpu_custom_call.1} parent=1 // pred_check_branch
      %152 = sbr.rel (%p150) target = $region29
    $region28: #{tpu_custom_call.1} parent=1 // pred_region
      %v153 = vld [vmem:[#allocation2] sm:$0xff]
      %v154 = vld [vmem:[#allocation2 + $0x8] sm:$0xff]
      %v155 = vld [vmem:[#allocation2 + $0x10] sm:$0x3]
      %v156 = vld [vmem:[%s2] sm:$0x1]
      %v158 = vlaneseq
      %v159 = vshrl.u32 %v158, 7
      %v160 = vsub.s32 0, %v159
      %v161 = vrot.slane %v156, %v160
      %v163 = vadd.f32 %v153, %v161
      %v164 = vadd.f32 %v154, %v161
      %v165 = vadd.f32 %v155, %v161
      %v166 = vpack.c.bf16 %v164, %v163
      %v167 = vpack.c.bf16 %v165, %v165
      %v170 = vunpack.c.l.b16 %v166
      %v171 = vunpack.c.h.b16 %v166
      %v172 = vunpack.c.l.b16 %v167
      %v173 = vpack.c.b16 %v170, %v170
      %v174 = vpack.c.b16 %v171, %v171
      %v175 = vpack.c.b16 %v172, %v172
      %vm179 = vcmask 257024
      %180 = vst.msk [vmem:[#allocation8] sm:$0xf] %vm179, %v173
      %181 = vst.msk [vmem:[#allocation8 + $0x4] sm:$0xf] %vm179, %v174
      %vm182 = vcmask 253952
      %183 = vst.msk [vmem:[#allocation8 + $0x8] sm:$0x1] %vm182, %v175
      %184 = vrot.lane.b32.xlu0 %v173, 96
      %v185 = vpop.permute.xlu0 %184
      %186 = vrot.lane.b32.xlu0 %v174, 96
      %v187 = vpop.permute.xlu0 %186
      %188 = vrot.lane.b32.xlu0 %v175, 96
      %v189 = vpop.permute.xlu0 %188
      %193 = vst.msk [vmem:[#allocation9] sm:$0xf] %vm179, %v185
      %194 = vst.msk [vmem:[#allocation9 + $0x4] sm:$0xf] %vm179, %v187
      %195 = vst.msk [vmem:[#allocation9 + $0x8] sm:$0x1] %vm182, %v189
      %196 = vrot.lane.b32.xlu0 %v173, 64
      %v197 = vpop.permute.xlu0 %196
      %198 = vrot.lane.b32.xlu0 %v174, 64
      %v199 = vpop.permute.xlu0 %198
      %200 = vrot.lane.b32.xlu0 %v175, 64
      %v201 = vpop.permute.xlu0 %200
      %205 = vst.msk [vmem:[#allocation11] sm:$0xf] %vm179, %v197
      %206 = vst.msk [vmem:[#allocation11 + $0x4] sm:$0xf] %vm179, %v199
      %207 = vst.msk [vmem:[#allocation11 + $0x8] sm:$0x1] %vm182, %v201
    $region29: #{tpu_custom_call.1} parent=1 // pred_fallthru
      _
    // Predicated region
    $region30: #{tpu_custom_call.1} parent=1 // pred_check
      _
    $region31: #{tpu_custom_call.1} parent=1 // pred_check_branch
      %209 = sbr.rel (0) target = $region33
    $region32: #{tpu_custom_call.1} parent=1 // pred_region
      %s211 = ssub.s32 192, 192
      %212 = vsyncadd [#allocation5], %s211
      %s213 = sshll.u32 [#allocation8], 4
      %s214 = int_to_ptr.vmem [resolvable:$true] %s213
      %219 = dma.vmem_to_hbm [thread:$0]  %s214, 192, %s3, [#allocation5], 64, 64, 4
    $region33: #{tpu_custom_call.1} parent=1 // pred_fallthru
      _
    // Predicated region
    $region34: #{tpu_custom_call.1} parent=1 // pred_check
      _
    $region35: #{tpu_custom_call.1} parent=1 // pred_check_branch
      %221 = sbr.rel (0) target = $region37
    $region36: #{tpu_custom_call.1} parent=1 // pred_region
      %s223 = ssub.s32 192, 192
      %224 = vsyncadd [#allocation10], %s223
      %s225 = sshll.u32 [#allocation9], 4
      %s226 = int_to_ptr.vmem [resolvable:$true] %s225
      %231 = dma.vmem_to_hbm [thread:$0]  %s226, 192, %s4, [#allocation10], 64, 64, 4
    $region37: #{tpu_custom_call.1} parent=1 // pred_fallthru
      _
    // Predicated region
    $region38: #{tpu_custom_call.1} parent=1 // pred_check
      _
    $region39: #{tpu_custom_call.1} parent=1 // pred_check_branch
      %233 = sbr.rel (0) target = $region41
    $region40: #{tpu_custom_call.1} parent=1 // pred_region
      %s235 = ssub.s32 192, 192
      %236 = vsyncadd [#allocation10], %s235
      %s237 = sshll.u32 [#allocation11], 4
      %s238 = int_to_ptr.vmem [resolvable:$true] %s237
      %243 = dma.vmem_to_hbm [thread:$0]  %s238, 192, %s5, [#allocation10], 64, 64, 4
    $region41: #{tpu_custom_call.1} parent=1 // pred_fallthru
      _
    // Predicated region
    $region42: #{tpu_custom_call.1} parent=1 // pred_check
      _
    $region43: #{tpu_custom_call.1} parent=1 // pred_check_branch
      %245 = sbr.rel (0) target = $region45
    $region44: #{tpu_custom_call.1} parent=1 // pred_region
      %246 = dma.done [#allocation5], 192
    $region45: #{tpu_custom_call.1} parent=1 // pred_fallthru
      _
    // Predicated region
    $region46: #{tpu_custom_call.1} parent=1 // pred_check
      _
    $region47: #{tpu_custom_call.1} parent=1 // pred_check_branch
      %248 = sbr.rel (0) target = $region49
    $region48: #{tpu_custom_call.1} parent=1 // pred_region
      %249 = dma.done [#allocation10], 192
    $region49: #{tpu_custom_call.1} parent=1 // pred_fallthru
      _
    // Predicated region
    $region50: #{tpu_custom_call.1} parent=1 // pred_check
      _
    $region51: #{tpu_custom_call.1} parent=1 // pred_check_branch
      %251 = sbr.rel (0) target = $region53
    $region52: #{tpu_custom_call.1} parent=1 // pred_region
      %252 = dma.done [#allocation10], 192
    $region53: #{tpu_custom_call.1} parent=1 // pred_fallthru
      _
    %253 = vsyncpa [#allocation4], 1
    %254 = vsyncpa [#allocation7], 1
    %255 = vsyncpa [#allocation5], 1
    %256 = vsyncpa [#allocation10], 1

</llo_original>
